<compile_context>
chip_gen: v6e
topology: v6e:2x2x1
jax: 0.10.0
libtpu: 0.0.40
codegen_flags: <defaults>
</compile_context>

<pallas_src>
import jax
import jax.numpy as jnp
from jax import lax
from jax.experimental import pallas as pl
from jax.experimental.pallas import tpu as pltpu

_LANE_WIDTHS = (512, 384, 256, 128)   # candidate lane-dense widths (mult. of 128)
_STRIP_ROWS = 256                     # rows per fori_loop strip inside a block


def _cdiv(a, b):
    return -(-a // b)


def _round_up(x, m):
    return _cdiv(x, m) * m


def _device_defaults():
    """Per-generation tiling knobs (this kernel is HBM-bandwidth-bound)."""
    kind = ""
    try:
        kind = jax.devices()[0].device_kind.lower()
    except Exception:
        pass
    if "v7" in kind or "7x" in kind:
        # 2 TensorCores, 64 MiB VMEM/TC, ~3.2 TB/s HBM: big blocks on both cores,
        # but keep scoped VMEM <= 48 MiB.
        return dict(num_partials=2, max_tile_rows=4096,
                    vmem_limit_bytes=48 * 1024 * 1024)
    if "v6" in kind:
        # Single TensorCore, 128 MiB VMEM: bigger blocks amortize the ~0.35us
        # per-grid-step overhead; 1 partial (no megacore) minimizes padding.
        return dict(num_partials=1, max_tile_rows=4096,
                    vmem_limit_bytes=64 * 1024 * 1024)
    # v5e / unknown: conservative.
    return dict(num_partials=1, max_tile_rows=2048,
                vmem_limit_bytes=32 * 1024 * 1024)


def _make_mse_kernel(*, tile_rows, strip_rows, lane_w, steps, valid_rows, ragged):
    """Sum of squared differences, accumulated into a lane-dense (8, lane_w) slab.

    Grid = (num_partials, steps): axis 0 "parallel" (disjoint output slab per
    partial -> v7x megacore split, no write races), axis 1 "arbitrary"
    streaming/reduction axis.  The output block index depends only on axis 0,
    so it stays VMEM-resident across the reduction and doubles as the
    accumulator.  The block is processed in `strip_rows`-row strips inside a
    fori_loop so the (strip, lane_w) temporaries stay small and bounded.
    """
    n_strips = tile_rows // strip_rows

    def kernel(pred_ref, label_ref, out_ref):
        step = pl.program_id(1)

        @pl.when(step == 0)
        def _init():
            out_ref[...] = jnp.zeros_like(out_ref)

        if ragged:
            blk = pl.program_id(0) * steps + step      # UNclamped block index
            block_row0 = blk * tile_rows               # global first row of block

        def strip_body(s, acc):
            r0 = pl.multiple_of(s * strip_rows, strip_rows)
            d = (pred_ref[pl.ds(r0, strip_rows), :].astype(jnp.float32)
                 - label_ref[pl.ds(r0, strip_rows), :].astype(jnp.float32))
            dd = d * d
            if ragged:
                # Zero rows past the true row count (covers both the ragged
                # boundary block and any fully-out-of-range duplicate block).
                row = block_row0 + r0 + lax.broadcasted_iota(
                    jnp.int32, (strip_rows, 1), 0)
                dd = jnp.where(row < valid_rows, dd, 0.0)
            # Pure-VPU partial reduce: fold groups of 8 rows onto (8, lane_w).
            return acc + jnp.sum(dd.reshape(strip_rows // 8, 8, lane_w), axis=0)

        acc = lax.fori_loop(0, n_strips, strip_body,
                            jnp.zeros((8, lane_w), jnp.float32))
        out_ref[...] += acc

    return kernel


def regression_loss(pred, label, *, min_pallas_elements=1 << 20, lane_w=None,
                    num_partials=None, max_tile_rows=None, vmem_limit_bytes=None):
    """MSE over all elements; matches nn.MSELoss()(pred, label) (f32 accumulate)."""
    assert pred.shape == label.shape, "pred and label must have the same shape"
    n = pred.size
    assert n > 0

    def _xla_mse(p, l):
        d = p.astype(jnp.float32) - l.astype(jnp.float32)
        return jnp.mean(d * d)

    # ---- small-input fast path: one fused XLA reduction beats Pallas launch
    #      + a second dispatch for the final sum below the streaming regime.
    if n < max(int(min_pallas_elements), 1):
        return _xla_mse(pred, label)

    # ---- keep f32/bf16/f16 in their wire dtype; anything else goes via f32.
    def _canon(x):
        return x if x.dtype in (jnp.float32, jnp.bfloat16, jnp.float16) \
            else x.astype(jnp.float32)
    pred, label = _canon(pred), _canon(label)
    itemsize = max(jnp.dtype(pred.dtype).itemsize, jnp.dtype(label.dtype).itemsize)
    granule = max(8, 32 // itemsize)     # packed-sublane granule (f32:8, bf16:16)

    # ---- pick a lane-dense width that divides n -> zero-copy reshape.
    if lane_w is None:
        lane_w = next((w for w in _LANE_WIDTHS if n % w == 0), _LANE_WIDTHS[0])
    assert lane_w % 128 == 0

    rows = n // lane_w
    if rows == 0:                        # forced-Pallas tiny input: nothing to tile
        return _xla_mse(pred, label)
    tail = n - rows * lane_w

    p_flat = pred.reshape(-1)            # free bitcast-reshape (contiguous)
    l_flat = label.reshape(-1)
    if tail:
        # Rare case (n not a multiple of 128): lane-aligned bulk goes through the
        # kernel, the <lane_w-element tail through one XLA sum.  The prefix slice
        # may materialize one copy of the bulk; strictly no worse than the old
        # full-array jnp.pad and never hit when 128 | n.
        bulk = rows * lane_w
        p2 = p_flat[:bulk].reshape(rows, lane_w)
        l2 = l_flat[:bulk].reshape(rows, lane_w)
        dt = p_flat[bulk:].astype(jnp.float32) - l_flat[bulk:].astype(jnp.float32)
        tail_sum = jnp.sum(dt * dt)
    else:
        p2 = p_flat.reshape(rows, lane_w)
        l2 = l_flat.reshape(rows, lane_w)
        tail_sum = jnp.float32(0.0)

    # ---- generation-aware tiling.
    cfg = _device_defaults()
    if num_partials is None:
        num_partials = cfg["num_partials"]
    if max_tile_rows is None:
        max_tile_rows = cfg["max_tile_rows"]
    if vmem_limit_bytes is None:
        vmem_limit_bytes = cfg["vmem_limit_bytes"]
    # Keep block *bytes* constant when a narrower lane width was selected.
    max_tile_rows = max(_STRIP_ROWS,
                        (max_tile_rows * (512 // lane_w)) // _STRIP_ROWS * _STRIP_ROWS)
    if rows < 2 * _STRIP_ROWS:
        num_partials = 1                 # too little work to split across cores

    rows_per_part = _cdiv(rows, num_partials)
    steps = _cdiv(rows_per_part, max_tile_rows)
    if rows_per_part >= _STRIP_ROWS:
        tile_rows = min(_round_up(_cdiv(rows_per_part, steps), _STRIP_ROWS),
                        max_tile_rows)
        strip_rows = _STRIP_ROWS
    else:
        tile_rows = _round_up(rows_per_part, granule)
        strip_rows = tile_rows
    steps = _cdiv(rows_per_part, tile_rows)
    ragged = num_partials * steps * tile_rows > rows

    kernel = _make_mse_kernel(tile_rows=tile_rows, strip_rows=strip_rows,
                              lane_w=lane_w, steps=steps, valid_rows=rows,
                              ragged=ragged)

    if ragged:
        # Clamp so no block's origin starts past the array (the in-kernel mask
        # uses the unclamped index, so duplicated blocks contribute exactly 0).
        max_blk = _cdiv(rows, tile_rows) - 1
        in_index = lambda p, i: (jnp.minimum(p * steps + i, max_blk), 0)
    else:
        in_index = lambda p, i: (p * steps + i, 0)

    partials = pl.pallas_call(
        kernel,
        out_shape=jax.ShapeDtypeStruct((num_partials * 8, lane_w), jnp.float32),
        grid_spec=pltpu.PrefetchScalarGridSpec(
            num_scalar_prefetch=0,
            grid=(num_partials, steps),
            in_specs=[pl.BlockSpec((tile_rows, lane_w), in_index),
                      pl.BlockSpec((tile_rows, lane_w), in_index)],
            out_specs=pl.BlockSpec((8, lane_w), lambda p, i: (p, 0)),
        ),
        compiler_params=pltpu.CompilerParams(
            dimension_semantics=("parallel", "arbitrary"),
            vmem_limit_bytes=int(vmem_limit_bytes),
        ),
    )(p2, l2)

    # Tiny final reduction + mean normalization in XLA.
    return (jnp.sum(partials) + tail_sum) / jnp.float32(n)


if __name__ == "__main__":
    key = jax.random.PRNGKey(0)
    ks = jax.random.split(key, 10)

    def check(pred, label, **kw):
        loss = jax.block_until_ready(regression_loss(pred, label, **kw))
        ref = jnp.mean((pred.astype(jnp.float32) - label.astype(jnp.float32)) ** 2)
        assert jnp.allclose(loss, ref, rtol=1e-5, atol=1e-6), (loss, ref)

    # RegressionLoss(num_class=4): pred/label of shape (batch, num_classes).
    # 1) (16, 4)  -> small-input fast path (single fused XLA reduction).
    check(jax.random.normal(ks[0], (16, 4), jnp.float32),
          jax.random.normal(ks[1], (16, 4), jnp.float32))

    # 2) (37, 5)  -> fast path, non-divisible shape.
    check(jax.random.normal(ks[2], (37, 5), jnp.float32),
          jax.random.normal(ks[3], (37, 5), jnp.float32))

    # 3) Force the Pallas path: zero-copy lane-dense view (n % 256 == 0),
    #    ragged final row-block masked in-kernel (no jnp.pad anywhere).
    check(jax.random.normal(ks[4], (256, 515), jnp.float32),
          jax.random.normal(ks[5], (256, 515), jnp.float32),
          min_pallas_elements=0)

    # 4) Pallas path with bf16 kept on the wire (halved HBM traffic).
    check(jax.random.normal(ks[6], (128, 512), jnp.bfloat16),
          jax.random.normal(ks[7], (128, 512), jnp.bfloat16),
          min_pallas_elements=0)

    # 5) Pallas path where no lane width divides n: aligned bulk in-kernel,
    #    <512-element tail summed in XLA.
    check(jax.random.normal(ks[8], (129, 130), jnp.float32),
          jax.random.normal(ks[9], (129, 130), jnp.float32),
          min_pallas_elements=0)

    print("KERNEL_OK")
</pallas_src>

<mosaic_0001>
module attributes {stable_mosaic.version = 11 : i64} {
  func.func @kernel(%arg0: i32, %arg1: i32, %arg2: memref<768x256xf32, #tpu.memory_space<vmem>>, %arg3: memref<768x256xf32, #tpu.memory_space<vmem>>, %arg4: memref<8x256xf32, #tpu.memory_space<vmem>>) attributes {dimension_semantics = [#tpu.dimension_semantics<parallel>, #tpu.dimension_semantics<arbitrary>], iteration_bounds = array<i64: 1, 1>, scalar_prefetch = 0 : i64, scratch_operands = 0 : i64, tpu.core_type = #tpu.core_type<tc>, window_params = [{transform_indices = @transform_0, window_bounds = array<i64: 768, 256>}, {transform_indices = @transform_1, window_bounds = array<i64: 768, 256>}, {transform_indices = @transform_2, window_bounds = array<i64: 8, 256>}]} {
    %c0_i32 = arith.constant 0 : i32
    %0 = arith.cmpi eq, %arg1, %c0_i32 : i32
    %1 = arith.extui %0 : i1 to i32
    %c0_i32_0 = arith.constant 0 : i32
    %2 = arith.cmpi ne, %1, %c0_i32_0 : i32
    scf.if %2 {
      %cst_7 = arith.constant 0.000000e+00 : f32
      %12 = vector.broadcast %cst_7 : f32 to vector<8x256xf32>
      %c0_8 = arith.constant 0 : index
      %c0_9 = arith.constant 0 : index
      %13 = vector.load %arg4[%c0_8, %c0_9] : memref<8x256xf32, #tpu.memory_space<vmem>>, vector<8x256xf32>
      tpu.vector_store %arg4[%c0_8, %c0_9], %12 {strides = array<i32>} : memref<8x256xf32, #tpu.memory_space<vmem>>, vector<8x256xf32>,
    } else {
    }
    %c1_i32 = arith.constant 1 : i32
    %3 = arith.muli %arg0, %c1_i32 : i32
    %4 = arith.addi %3, %arg1 : i32
    %c768_i32 = arith.constant 768 : i32
    %5 = arith.muli %4, %c768_i32 : i32
    %cst = arith.constant 0.000000e+00 : f32
    %6 = vector.broadcast %cst : f32 to vector<8x256xf32>
    %c0_i32_1 = arith.constant 0 : i32
    %c3_i32 = arith.constant 3 : i32
    %7 = arith.addi %c0_i32_1, %c3_i32 : i32
    %c1_i32_2 = arith.constant 1 : i32
    %8 = scf.for %arg5 = %c0_i32_1 to %7 step %c1_i32_2 iter_args(%arg6 = %6) -> (vector<8x256xf32>)  : i32 {
      %c256_i32 = arith.constant 256 : i32
      %12 = arith.muli %arg5, %c256_i32 : i32
      %13 = tpu.assume_multiple %12, 256 : i32
      %14 = arith.index_cast %13 : i32 to index
      %c0_7 = arith.constant 0 : index
      %15 = vector.load %arg2[%14, %c0_7] : memref<768x256xf32, #tpu.memory_space<vmem>>, vector<256x256xf32>
      %16 = arith.index_cast %13 : i32 to index
      %c0_8 = arith.constant 0 : index
      %17 = vector.load %arg3[%16, %c0_8] : memref<768x256xf32, #tpu.memory_space<vmem>>, vector<256x256xf32>
      %18 = arith.subf %15, %17 : vector<256x256xf32>
      %19 = arith.mulf %18, %18 : vector<256x256xf32>
      %20 = arith.addi %5, %13 : i32
      %21 = tpu.iota {dimensions = array<i32: 0>} : vector<256x1xi32>
      %22 = vector.broadcast %20 : i32 to vector<256x1xi32>
      %23 = arith.addi %22, %21 : vector<256x1xi32>
      %c515_i32 = arith.constant 515 : i32
      %24 = vector.broadcast %c515_i32 : i32 to vector<256x1xi32>
      %25 = arith.cmpi slt, %23, %24 : vector<256x1xi32>
      %cst_9 = arith.constant 0.000000e+00 : f32
      %26 = vector.shape_cast %25 : vector<256x1xi1> to vector<256x1xi1>
      %27 = vector.broadcast %26 : vector<256x1xi1> to vector<256x256xi1>
      %28 = vector.broadcast %cst_9 : f32 to vector<256x256xf32>
      %29 = arith.select %27, %19, %28 : vector<256x256xi1>, vector<256x256xf32>
      %30 = vector.shape_cast %29 : vector<256x256xf32> to vector<32x8x256xf32>
      %cst_10 = arith.constant dense<0.000000e+00> : vector<8x256xf32>
      %31 = vector.multi_reduction <add>, %30, %cst_10 [0] : vector<32x8x256xf32> to vector<8x256xf32>
      %32 = arith.addf %arg6, %31 : vector<8x256xf32>
      scf.yield %32 : vector<8x256xf32>
    }
    %c3_i32_3 = arith.constant 3 : i32
    %c0 = arith.constant 0 : index
    %c0_4 = arith.constant 0 : index
    %9 = vector.load %arg4[%c0, %c0_4] : memref<8x256xf32, #tpu.memory_space<vmem>>, vector<8x256xf32>
    %10 = arith.addf %9, %8 : vector<8x256xf32>
    %c0_5 = arith.constant 0 : index
    %c0_6 = arith.constant 0 : index
    %11 = vector.load %arg4[%c0_5, %c0_6] : memref<8x256xf32, #tpu.memory_space<vmem>>, vector<8x256xf32>
    tpu.vector_store %arg4[%c0_5, %c0_6], %10 {strides = array<i32>} : memref<8x256xf32, #tpu.memory_space<vmem>>, vector<8x256xf32>,
    return
  }
  func.func @transform_0(%arg0: i32, %arg1: i32) -> (i32, i32) {
    %c1_i32 = arith.constant 1 : i32
    %0 = arith.muli %arg0, %c1_i32 : i32
    %1 = arith.addi %0, %arg1 : i32
    %c0_i32 = arith.constant 0 : i32
    %2 = arith.minsi %1, %c0_i32 : i32
    %c0_i32_0 = arith.constant 0 : i32
    %c0_i32_1 = arith.constant 0 : i32
    return %2, %c0_i32_0 : i32, i32
  }
  func.func @transform_1(%arg0: i32, %arg1: i32) -> (i32, i32) {
    %c1_i32 = arith.constant 1 : i32
    %0 = arith.muli %arg0, %c1_i32 : i32
    %1 = arith.addi %0, %arg1 : i32
    %c0_i32 = arith.constant 0 : i32
    %2 = arith.minsi %1, %c0_i32 : i32
    %c0_i32_0 = arith.constant 0 : i32
    %c0_i32_1 = arith.constant 0 : i32
    return %2, %c0_i32_0 : i32, i32
  }
  func.func @transform_2(%arg0: i32, %arg1: i32) -> (i32, i32) {
    %c0_i32 = arith.constant 0 : i32
    %c0_i32_0 = arith.constant 0 : i32
    return %arg0, %c0_i32 : i32, i32
  }
}

</mosaic_0001>

<llo_original>
// kernel: tpu_custom_call.1
$region0: #{tpu_custom_call.1}
  #allocation0 [shape = 'u32[]', space=smem, size = 0x4, offset = 0x4, fixed_abs, tag = 'smem constant byte address 0x4 - core index']
  #allocation1 [shape = 'u32[144,128]{1,0:T(1,128)}', space=vmem, size = 0x12000, scoped, tag = 'internal scratch']
  %s0 = inlined_call_operand.hbm [shape: f32[515,256], index: 0, kind: input, shape index: {}]
  %s1 = inlined_call_operand.hbm [shape: f32[515,256], index: 1, kind: input, shape index: {}]
  %s2 = inlined_call_operand.hbm [shape: f32[8,256], index: 2, kind: output, shape index: {}]
  %s3 = sld [smem:[#allocation0]]
  $region37: #{tpu_custom_call.1} parent=0
    _
  %s5 = ssub.s32 1, %s3
  %s6 = scalar_select 0, %s5, %s3
  $region1: #{tpu_custom_call.1} parent=0
    #allocation2 [shape = 'u8[786432]{0}', space=vmem, size = 0xc0000, scoped, tag = 'input window, operand 0, single buffered']
    #allocation3 [shape = 's32[1]{0}', space=sflag, size = 0x4, scoped, tag = 'scoped memory for tpu_custom_call.1']
    #allocation4 [shape = 's32[1]{0}', space=sflag, size = 0x4, scoped, tag = 'scoped memory for tpu_custom_call.1']
    #allocation5 [shape = 'u8[786432]{0}', space=vmem, size = 0xc0000, scoped, tag = 'input window, operand 1, single buffered']
    #allocation6 [shape = 's32[1]{0}', space=sflag, size = 0x4, scoped, tag = 'scoped memory for tpu_custom_call.1']
    #allocation7 [shape = 'u8[8192]{0}', space=vmem, size = 0x2000, scoped, tag = 'output window, operand 0, single buffered']
    %7 = vsyncpa [#allocation3], 0
    %8 = vsyncpa [#allocation6], 0
    %9 = vsyncpa [#allocation4], 0
    // Predicated region
    $region2: #{tpu_custom_call.1} parent=1 // pred_check
      _
    $region3: #{tpu_custom_call.1} parent=1 // pred_check_branch
      %11 = sbr.rel (0) target = $region5
    $region4: #{tpu_custom_call.1} parent=1 // pred_region
      %s12 = sadd.s32 0, 0
      %p13 = scmp.lt.s32.totalorder %s12, 0
      %s14 = scalar_select %p13, %s12, 0
      %s15 = smul.u32 96, %s14
      %s16 = ssub.s32 65, %s15
      %s17 = smul.u32 128, %s16
      %s18 = smul.u32 %s17, 2
      %s20 = ssub.s32 24576, %s18
      %21 = vsyncadd [#allocation3], %s20
      %p22 = scmp.ne.s32.totalorder 0, %s18
      %s23 = smul.addr %s15, 2
      %s24 = smul.addr %s23, 128
      %s25 = scalar_lea.hbm %s0, %s24
      %s26 = smul.u32 16, %s16
      %s27 = sshll.u32 [#allocation2], 4
      %s28 = int_to_ptr.vmem [resolvable:$true] %s27
      %s29 = sshll.u32 %s26, 4
      %33 = dma.hbm_to_vmem [thread:$0]  (%p22), %s25, %s29, %s28, [#allocation3], 256, 256, 16
    $region5: #{tpu_custom_call.1} parent=1 // pred_fallthru
      _
    // Predicated region
    $region6: #{tpu_custom_call.1} parent=1 // pred_check
      _
    $region7: #{tpu_custom_call.1} parent=1 // pred_check_branch
      %35 = sbr.rel (0) target = $region9
    $region8: #{tpu_custom_call.1} parent=1 // pred_region
      %s36 = sadd.s32 0, 0
      %p37 = scmp.lt.s32.totalorder %s36, 0
      %s38 = scalar_select %p37, %s36, 0
      %s39 = smul.u32 96, %s38
      %s40 = ssub.s32 65, %s39
      %s41 = smul.u32 128, %s40
      %s42 = smul.u32 %s41, 2
      %s44 = ssub.s32 24576, %s42
      %45 = vsyncadd [#allocation6], %s44
      %p46 = scmp.ne.s32.totalorder 0, %s42
      %s47 = smul.addr %s39, 2
      %s48 = smul.addr %s47, 128
      %s49 = scalar_lea.hbm %s1, %s48
      %s50 = smul.u32 16, %s40
      %s51 = sshll.u32 [#allocation5], 4
      %s52 = int_to_ptr.vmem [resolvable:$true] %s51
      %s53 = sshll.u32 %s50, 4
      %57 = dma.hbm_to_vmem [thread:$0]  (%p46), %s49, %s53, %s52, [#allocation6], 256, 256, 16
    $region9: #{tpu_custom_call.1} parent=1 // pred_fallthru
      _
    // Predicated region
    $region10: #{tpu_custom_call.1} parent=1 // pred_check
      _
    $region11: #{tpu_custom_call.1} parent=1 // pred_check_branch
      %59 = sbr.rel (0) target = $region13
    $region12: #{tpu_custom_call.1} parent=1 // pred_region
      %60 = dma.done [#allocation3], 24576
    $region13: #{tpu_custom_call.1} parent=1 // pred_fallthru
      _
    // Predicated region
    $region14: #{tpu_custom_call.1} parent=1 // pred_check
      _
    $region15: #{tpu_custom_call.1} parent=1 // pred_check_branch
      %62 = sbr.rel (0) target = $region17
    $region16: #{tpu_custom_call.1} parent=1 // pred_region
      %63 = dma.done [#allocation6], 24576
    $region17: #{tpu_custom_call.1} parent=1 // pred_fallthru
      _
    %s64 = sadd.s32 0, 0
    %p65 = scmp.lt.s32.totalorder %s64, 0
    %s66 = scalar_select %p65, %s64, 0
    %s67 = smul.u32 96, %s66
    %s68 = ssub.s32 65, %s67
    %s69 = smul.u32 128, %s68
    %s70 = smul.u32 %s69, 2
    %s71 = sadd.s32 0, 0
    %p72 = scmp.lt.s32.totalorder %s71, 0
    %s73 = scalar_select %p72, %s71, 0
    %s74 = smul.u32 96, %s73
    %s75 = ssub.s32 65, %s74
    %s76 = smul.u32 128, %s75
    %s77 = smul.u32 %s76, 2
    %p78 = scmp.eq.s32.totalorder 0, 0
    // Predicated region
    $region18: #{tpu_custom_call.1} parent=1 // pred_check
      %p79 = pneg %p78
    $region19: #{tpu_custom_call.1} parent=1 // pred_check_branch
      %81 = sbr.rel (%p79) target = $region21
    $region20: #{tpu_custom_call.1} parent=1 // pred_region
      %82 = vst [vmem:[#allocation7] sm:$0xff] 0.0
      %83 = vst [vmem:[#allocation7 + $0x8] sm:$0xff] 0.0
    $region21: #{tpu_custom_call.1} parent=1 // pred_fallthru
      _
    %s84 = sadd.s32 0, 0
    %s85 = smul.u32 %s84, 768
    loop: start=0, step=1, limit=3
    $region22: #{tpu_custom_call.1} parent=1 // loop_pre_header
      _
    $region23: #{tpu_custom_call.1} parent=1 // loop_header
      %s87 = sphi 0, %s91
      %p88 = scmp.ge.s32.totalorder %s87, 3
      %v92 = vphi 0.0, %v647
      %v93 = vphi 0.0, %v648
    $region24: #{tpu_custom_call.1} parent=1 // loop_header_branch
      %90 = sbr.rel (%p88) target = $region28
    $region25: #{tpu_custom_call.1} parent=1 // loop_body
      %s94 = smul.u32 %s87, 256
      %s95 = sshra.s32 %s94, 3
      %s96 = sand.u32 %s94, 7
      %s97 = smul.u32 %s95, 2
      %s98 = smul.addr %s97, 8
      %s99 = scalar_lea.vmem [#allocation2], %s98
      %v100 = vld [vmem:[%s99] sm:$0xff]
      %v101 = vld [vmem:[%s99 + $0x8] sm:$0xff]
      %v102 = vld [vmem:[%s99 + $0x10] sm:$0xff]
      %v103 = vld [vmem:[%s99 + $0x18] sm:$0xff]
      %v104 = vld [vmem:[%s99 + $0x20] sm:$0xff]
      %v105 = vld [vmem:[%s99 + $0x28] sm:$0xff]
      %v106 = vld [vmem:[%s99 + $0x30] sm:$0xff]
      %v107 = vld [vmem:[%s99 + $0x38] sm:$0xff]
      %v108 = vld [vmem:[%s99 + $0x40] sm:$0xff]
      %v109 = vld [vmem:[%s99 + $0x48] sm:$0xff]
      %v110 = vld [vmem:[%s99 + $0x50] sm:$0xff]
      %v111 = vld [vmem:[%s99 + $0x58] sm:$0xff]
      %v112 = vld [vmem:[%s99 + $0x60] sm:$0xff]
      %v113 = vld [vmem:[%s99 + $0x68] sm:$0xff]
      %v114 = vld [vmem:[%s99 + $0x70] sm:$0xff]
      %v115 = vld [vmem:[%s99 + $0x78] sm:$0xff]
      %v116 = vld [vmem:[%s99 + $0x80] sm:$0xff]
      %v117 = vld [vmem:[%s99 + $0x88] sm:$0xff]
      %v118 = vld [vmem:[%s99 + $0x90] sm:$0xff]
      %v119 = vld [vmem:[%s99 + $0x98] sm:$0xff]
      %v120 = vld [vmem:[%s99 + $0xa0] sm:$0xff]
      %v121 = vld [vmem:[%s99 + $0xa8] sm:$0xff]
      %v122 = vld [vmem:[%s99 + $0xb0] sm:$0xff]
      %v123 = vld [vmem:[%s99 + $0xb8] sm:$0xff]
      %v124 = vld [vmem:[%s99 + $0xc0] sm:$0xff]
      %v125 = vld [vmem:[%s99 + $0xc8] sm:$0xff]
      %v126 = vld [vmem:[%s99 + $0xd0] sm:$0xff]
      %v127 = vld [vmem:[%s99 + $0xd8] sm:$0xff]
      %v128 = vld [vmem:[%s99 + $0xe0] sm:$0xff]
      %v129 = vld [vmem:[%s99 + $0xe8] sm:$0xff]
      %v130 = vld [vmem:[%s99 + $0xf0] sm:$0xff]
      %v131 = vld [vmem:[%s99 + $0xf8] sm:$0xff]
      %v132 = vld [vmem:[%s99 + $0x100] sm:$0xff]
      %v133 = vld [vmem:[%s99 + $0x108] sm:$0xff]
      %v134 = vld [vmem:[%s99 + $0x110] sm:$0xff]
      %v135 = vld [vmem:[%s99 + $0x118] sm:$0xff]
      %v136 = vld [vmem:[%s99 + $0x120] sm:$0xff]
      %v137 = vld [vmem:[%s99 + $0x128] sm:$0xff]
      %v138 = vld [vmem:[%s99 + $0x130] sm:$0xff]
      %v139 = vld [vmem:[%s99 + $0x138] sm:$0xff]
      %v140 = vld [vmem:[%s99 + $0x140] sm:$0xff]
      %v141 = vld [vmem:[%s99 + $0x148] sm:$0xff]
      %v142 = vld [vmem:[%s99 + $0x150] sm:$0xff]
      %v143 = vld [vmem:[%s99 + $0x158] sm:$0xff]
      %v144 = vld [vmem:[%s99 + $0x160] sm:$0xff]
      %v145 = vld [vmem:[%s99 + $0x168] sm:$0xff]
      %v146 = vld [vmem:[%s99 + $0x170] sm:$0xff]
      %v147 = vld [vmem:[%s99 + $0x178] sm:$0xff]
      %v148 = vld [vmem:[%s99 + $0x180] sm:$0xff]
      %v149 = vld [vmem:[%s99 + $0x188] sm:$0xff]
      %v150 = vld [vmem:[%s99 + $0x190] sm:$0xff]
      %v151 = vld [vmem:[%s99 + $0x198] sm:$0xff]
      %v152 = vld [vmem:[%s99 + $0x1a0] sm:$0xff]
      %v153 = vld [vmem:[%s99 + $0x1a8] sm:$0xff]
      %v154 = vld [vmem:[%s99 + $0x1b0] sm:$0xff]
      %v155 = vld [vmem:[%s99 + $0x1b8] sm:$0xff]
      %v156 = vld [vmem:[%s99 + $0x1c0] sm:$0xff]
      %v157 = vld [vmem:[%s99 + $0x1c8] sm:$0xff]
      %v158 = vld [vmem:[%s99 + $0x1d0] sm:$0xff]
      %v159 = vld [vmem:[%s99 + $0x1d8] sm:$0xff]
      %v160 = vld [vmem:[%s99 + $0x1e0] sm:$0xff]
      %v161 = vld [vmem:[%s99 + $0x1e8] sm:$0xff]
      %v162 = vld [vmem:[%s99 + $0x1f0] sm:$0xff]
      %v163 = vld [vmem:[%s99 + $0x1f8] sm:$0xff]
      %s164 = smul.addr %s97, 8
      %s165 = scalar_lea.vmem [#allocation5], %s164
      %v166 = vld [vmem:[%s165] sm:$0xff]
      %v167 = vld [vmem:[%s165 + $0x8] sm:$0xff]
      %v168 = vld [vmem:[%s165 + $0x10] sm:$0xff]
      %v169 = vld [vmem:[%s165 + $0x18] sm:$0xff]
      %v170 = vld [vmem:[%s165 + $0x20] sm:$0xff]
      %v171 = vld [vmem:[%s165 + $0x28] sm:$0xff]
      %v172 = vld [vmem:[%s165 + $0x30] sm:$0xff]
      %v173 = vld [vmem:[%s165 + $0x38] sm:$0xff]
      %v174 = vld [vmem:[%s165 + $0x40] sm:$0xff]
      %v175 = vld [vmem:[%s165 + $0x48] sm:$0xff]
      %v176 = vld [vmem:[%s165 + $0x50] sm:$0xff]
      %v177 = vld [vmem:[%s165 + $0x58] sm:$0xff]
      %v178 = vld [vmem:[%s165 + $0x60] sm:$0xff]
      %v179 = vld [vmem:[%s165 + $0x68] sm:$0xff]
      %v180 = vld [vmem:[%s165 + $0x70] sm:$0xff]
      %v181 = vld [vmem:[%s165 + $0x78] sm:$0xff]
      %v182 = vld [vmem:[%s165 + $0x80] sm:$0xff]
      %v183 = vld [vmem:[%s165 + $0x88] sm:$0xff]
      %v184 = vld [vmem:[%s165 + $0x90] sm:$0xff]
      %v185 = vld [vmem:[%s165 + $0x98] sm:$0xff]
      %v186 = vld [vmem:[%s165 + $0xa0] sm:$0xff]
      %v187 = vld [vmem:[%s165 + $0xa8] sm:$0xff]
      %v188 = vld [vmem:[%s165 + $0xb0] sm:$0xff]
      %v189 = vld [vmem:[%s165 + $0xb8] sm:$0xff]
      %v190 = vld [vmem:[%s165 + $0xc0] sm:$0xff]
      %v191 = vld [vmem:[%s165 + $0xc8] sm:$0xff]
      %v192 = vld [vmem:[%s165 + $0xd0] sm:$0xff]
      %v193 = vld [vmem:[%s165 + $0xd8] sm:$0xff]
      %v194 = vld [vmem:[%s165 + $0xe0] sm:$0xff]
      %v195 = vld [vmem:[%s165 + $0xe8] sm:$0xff]
      %v196 = vld [vmem:[%s165 + $0xf0] sm:$0xff]
      %v197 = vld [vmem:[%s165 + $0xf8] sm:$0xff]
      %v198 = vld [vmem:[%s165 + $0x100] sm:$0xff]
      %v199 = vld [vmem:[%s165 + $0x108] sm:$0xff]
      %v200 = vld [vmem:[%s165 + $0x110] sm:$0xff]
      %v201 = vld [vmem:[%s165 + $0x118] sm:$0xff]
      %v202 = vld [vmem:[%s165 + $0x120] sm:$0xff]
      %v203 = vld [vmem:[%s165 + $0x128] sm:$0xff]
      %v204 = vld [vmem:[%s165 + $0x130] sm:$0xff]
      %v205 = vld [vmem:[%s165 + $0x138] sm:$0xff]
      %v206 = vld [vmem:[%s165 + $0x140] sm:$0xff]
      %v207 = vld [vmem:[%s165 + $0x148] sm:$0xff]
      %v208 = vld [vmem:[%s165 + $0x150] sm:$0xff]
      %v209 = vld [vmem:[%s165 + $0x158] sm:$0xff]
      %v210 = vld [vmem:[%s165 + $0x160] sm:$0xff]
      %v211 = vld [vmem:[%s165 + $0x168] sm:$0xff]
      %v212 = vld [vmem:[%s165 + $0x170] sm:$0xff]
      %v213 = vld [vmem:[%s165 + $0x178] sm:$0xff]
      %v214 = vld [vmem:[%s165 + $0x180] sm:$0xff]
      %v215 = vld [vmem:[%s165 + $0x188] sm:$0xff]
      %v216 = vld [vmem:[%s165 + $0x190] sm:$0xff]
      %v217 = vld [vmem:[%s165 + $0x198] sm:$0xff]
      %v218 = vld [vmem:[%s165 + $0x1a0] sm:$0xff]
      %v219 = vld [vmem:[%s165 + $0x1a8] sm:$0xff]
      %v220 = vld [vmem:[%s165 + $0x1b0] sm:$0xff]
      %v221 = vld [vmem:[%s165 + $0x1b8] sm:$0xff]
      %v222 = vld [vmem:[%s165 + $0x1c0] sm:$0xff]
      %v223 = vld [vmem:[%s165 + $0x1c8] sm:$0xff]
      %v224 = vld [vmem:[%s165 + $0x1d0] sm:$0xff]
      %v225 = vld [vmem:[%s165 + $0x1d8] sm:$0xff]
      %v226 = vld [vmem:[%s165 + $0x1e0] sm:$0xff]
      %v227 = vld [vmem:[%s165 + $0x1e8] sm:$0xff]
      %v228 = vld [vmem:[%s165 + $0x1f0] sm:$0xff]
      %v229 = vld [vmem:[%s165 + $0x1f8] sm:$0xff]
      %v230 = vsub.f32 %v100, %v166
      %v231 = vsub.f32 %v101, %v167
      %v232 = vsub.f32 %v102, %v168
      %v233 = vsub.f32 %v103, %v169
      %v234 = vsub.f32 %v104, %v170
      %v235 = vsub.f32 %v105, %v171
      %v236 = vsub.f32 %v106, %v172
      %v237 = vsub.f32 %v107, %v173
      %v238 = vsub.f32 %v108, %v174
      %v239 = vsub.f32 %v109, %v175
      %v240 = vsub.f32 %v110, %v176
      %v241 = vsub.f32 %v111, %v177
      %v242 = vsub.f32 %v112, %v178
      %v243 = vsub.f32 %v113, %v179
      %v244 = vsub.f32 %v114, %v180
      %v245 = vsub.f32 %v115, %v181
      %v246 = vsub.f32 %v116, %v182
      %v247 = vsub.f32 %v117, %v183
      %v248 = vsub.f32 %v118, %v184
      %v249 = vsub.f32 %v119, %v185
      %v250 = vsub.f32 %v120, %v186
      %v251 = vsub.f32 %v121, %v187
      %v252 = vsub.f32 %v122, %v188
      %v253 = vsub.f32 %v123, %v189
      %v254 = vsub.f32 %v124, %v190
      %v255 = vsub.f32 %v125, %v191
      %v256 = vsub.f32 %v126, %v192
      %v257 = vsub.f32 %v127, %v193
      %v258 = vsub.f32 %v128, %v194
      %v259 = vsub.f32 %v129, %v195
      %v260 = vsub.f32 %v130, %v196
      %v261 = vsub.f32 %v131, %v197
      %v262 = vsub.f32 %v132, %v198
      %v263 = vsub.f32 %v133, %v199
      %v264 = vsub.f32 %v134, %v200
      %v265 = vsub.f32 %v135, %v201
      %v266 = vsub.f32 %v136, %v202
      %v267 = vsub.f32 %v137, %v203
      %v268 = vsub.f32 %v138, %v204
      %v269 = vsub.f32 %v139, %v205
      %v270 = vsub.f32 %v140, %v206
      %v271 = vsub.f32 %v141, %v207
      %v272 = vsub.f32 %v142, %v208
      %v273 = vsub.f32 %v143, %v209
      %v274 = vsub.f32 %v144, %v210
      %v275 = vsub.f32 %v145, %v211
      %v276 = vsub.f32 %v146, %v212
      %v277 = vsub.f32 %v147, %v213
      %v278 = vsub.f32 %v148, %v214
      %v279 = vsub.f32 %v149, %v215
      %v280 = vsub.f32 %v150, %v216
      %v281 = vsub.f32 %v151, %v217
      %v282 = vsub.f32 %v152, %v218
      %v283 = vsub.f32 %v153, %v219
      %v284 = vsub.f32 %v154, %v220
      %v285 = vsub.f32 %v155, %v221
      %v286 = vsub.f32 %v156, %v222
      %v287 = vsub.f32 %v157, %v223
      %v288 = vsub.f32 %v158, %v224
      %v289 = vsub.f32 %v159, %v225
      %v290 = vsub.f32 %v160, %v226
      %v291 = vsub.f32 %v161, %v227
      %v292 = vsub.f32 %v162, %v228
      %v293 = vsub.f32 %v163, %v229
      %v294 = vmul.f32 %v230, %v230
      %v295 = vmul.f32 %v231, %v231
      %v296 = vmul.f32 %v232, %v232
      %v297 = vmul.f32 %v233, %v233
      %v298 = vmul.f32 %v234, %v234
      %v299 = vmul.f32 %v235, %v235
      %v300 = vmul.f32 %v236, %v236
      %v301 = vmul.f32 %v237, %v237
      %v302 = vmul.f32 %v238, %v238
      %v303 = vmul.f32 %v239, %v239
      %v304 = vmul.f32 %v240, %v240
      %v305 = vmul.f32 %v241, %v241
      %v306 = vmul.f32 %v242, %v242
      %v307 = vmul.f32 %v243, %v243
      %v308 = vmul.f32 %v244, %v244
      %v309 = vmul.f32 %v245, %v245
      %v310 = vmul.f32 %v246, %v246
      %v311 = vmul.f32 %v247, %v247
      %v312 = vmul.f32 %v248, %v248
      %v313 = vmul.f32 %v249, %v249
      %v314 = vmul.f32 %v250, %v250
      %v315 = vmul.f32 %v251, %v251
      %v316 = vmul.f32 %v252, %v252
      %v317 = vmul.f32 %v253, %v253
      %v318 = vmul.f32 %v254, %v254
      %v319 = vmul.f32 %v255, %v255
      %v320 = vmul.f32 %v256, %v256
      %v321 = vmul.f32 %v257, %v257
      %v322 = vmul.f32 %v258, %v258
      %v323 = vmul.f32 %v259, %v259
      %v324 = vmul.f32 %v260, %v260
      %v325 = vmul.f32 %v261, %v261
      %v326 = vmul.f32 %v262, %v262
      %v327 = vmul.f32 %v263, %v263
      %v328 = vmul.f32 %v264, %v264
      %v329 = vmul.f32 %v265, %v265
      %v330 = vmul.f32 %v266, %v266
      %v331 = vmul.f32 %v267, %v267
      %v332 = vmul.f32 %v268, %v268
      %v333 = vmul.f32 %v269, %v269
      %v334 = vmul.f32 %v270, %v270
      %v335 = vmul.f32 %v271, %v271
      %v336 = vmul.f32 %v272, %v272
      %v337 = vmul.f32 %v273, %v273
      %v338 = vmul.f32 %v274, %v274
      %v339 = vmul.f32 %v275, %v275
      %v340 = vmul.f32 %v276, %v276
      %v341 = vmul.f32 %v277, %v277
      %v342 = vmul.f32 %v278, %v278
      %v343 = vmul.f32 %v279, %v279
      %v344 = vmul.f32 %v280, %v280
      %v345 = vmul.f32 %v281, %v281
      %v346 = vmul.f32 %v282, %v282
      %v347 = vmul.f32 %v283, %v283
      %v348 = vmul.f32 %v284, %v284
      %v349 = vmul.f32 %v285, %v285
      %v350 = vmul.f32 %v286, %v286
      %v351 = vmul.f32 %v287, %v287
      %v352 = vmul.f32 %v288, %v288
      %v353 = vmul.f32 %v289, %v289
      %v354 = vmul.f32 %v290, %v290
      %v355 = vmul.f32 %v291, %v291
      %v356 = vmul.f32 %v292, %v292
      %v357 = vmul.f32 %v293, %v293
      %s358 = sadd.s32 %s85, %s94
      %v359 = vlaneseq
      %v360 = vshrl.u32 %v359, 7
      %v361 = vadd.s32 %v360, 8
      %v362 = vadd.s32 %v360, 16
      %v363 = vadd.s32 %v360, 24
      %v364 = vadd.s32 %v360, 32
      %v365 = vadd.s32 %v360, 40
      %v366 = vadd.s32 %v360, 48
      %v367 = vadd.s32 %v360, 56
      %v368 = vadd.s32 %v360, 64
      %v369 = vadd.s32 %v360, 72
      %v370 = vadd.s32 %v360, 80
      %v371 = vadd.s32 %v360, 88
      %v372 = vadd.s32 %v360, 96
      %v373 = vadd.s32 %v360, 104
      %v374 = vadd.s32 %v360, 112
      %v375 = vadd.s32 %v360, 120
      %v376 = vadd.s32 %v360, 128
      %v377 = vadd.s32 %v360, 136
      %v378 = vadd.s32 %v360, 144
      %v379 = vadd.s32 %v360, 152
      %v380 = vadd.s32 %v360, 160
      %v381 = vadd.s32 %v360, 168
      %v382 = vadd.s32 %v360, 176
      %v383 = vadd.s32 %v360, 184
      %v384 = vadd.s32 %v360, 192
      %v385 = vadd.s32 %v360, 200
      %v386 = vadd.s32 %v360, 208
      %v387 = vadd.s32 %v360, 216
      %v388 = vadd.s32 %v360, 224
      %v389 = vadd.s32 %v360, 232
      %v390 = vadd.s32 %v360, 240
      %v391 = vadd.s32 %v360, 248
      %v392 = vstv %s358
      %v393 = vadd.s32 %v392, %v360
      %v394 = vadd.s32 %v392, %v361
      %v395 = vadd.s32 %v392, %v362
      %v396 = vadd.s32 %v392, %v363
      %v397 = vadd.s32 %v392, %v364
      %v398 = vadd.s32 %v392, %v365
      %v399 = vadd.s32 %v392, %v366
      %v400 = vadd.s32 %v392, %v367
      %v401 = vadd.s32 %v392, %v368
      %v402 = vadd.s32 %v392, %v369
      %v403 = vadd.s32 %v392, %v370
      %v404 = vadd.s32 %v392, %v371
      %v405 = vadd.s32 %v392, %v372
      %v406 = vadd.s32 %v392, %v373
      %v407 = vadd.s32 %v392, %v374
      %v408 = vadd.s32 %v392, %v375
      %v409 = vadd.s32 %v392, %v376
      %v410 = vadd.s32 %v392, %v377
      %v411 = vadd.s32 %v392, %v378
      %v412 = vadd.s32 %v392, %v379
      %v413 = vadd.s32 %v392, %v380
      %v414 = vadd.s32 %v392, %v381
      %v415 = vadd.s32 %v392, %v382
      %v416 = vadd.s32 %v392, %v383
      %v417 = vadd.s32 %v392, %v384
      %v418 = vadd.s32 %v392, %v385
      %v419 = vadd.s32 %v392, %v386
      %v420 = vadd.s32 %v392, %v387
      %v421 = vadd.s32 %v392, %v388
      %v422 = vadd.s32 %v392, %v389
      %v423 = vadd.s32 %v392, %v390
      %v424 = vadd.s32 %v392, %v391
      %vm425 = vcmp.lt.s32.totalorder %v393, 515
      %vm426 = vcmp.lt.s32.totalorder %v394, 515
      %vm427 = vcmp.lt.s32.totalorder %v395, 515
      %vm428 = vcmp.lt.s32.totalorder %v396, 515
      %vm429 = vcmp.lt.s32.totalorder %v397, 515
      %vm430 = vcmp.lt.s32.totalorder %v398, 515
      %vm431 = vcmp.lt.s32.totalorder %v399, 515
      %vm432 = vcmp.lt.s32.totalorder %v400, 515
      %vm433 = vcmp.lt.s32.totalorder %v401, 515
      %vm434 = vcmp.lt.s32.totalorder %v402, 515
      %vm435 = vcmp.lt.s32.totalorder %v403, 515
      %vm436 = vcmp.lt.s32.totalorder %v404, 515
      %vm437 = vcmp.lt.s32.totalorder %v405, 515
      %vm438 = vcmp.lt.s32.totalorder %v406, 515
      %vm439 = vcmp.lt.s32.totalorder %v407, 515
      %vm440 = vcmp.lt.s32.totalorder %v408, 515
      %vm441 = vcmp.lt.s32.totalorder %v409, 515
      %vm442 = vcmp.lt.s32.totalorder %v410, 515
      %vm443 = vcmp.lt.s32.totalorder %v411, 515
      %vm444 = vcmp.lt.s32.totalorder %v412, 515
      %vm445 = vcmp.lt.s32.totalorder %v413, 515
      %vm446 = vcmp.lt.s32.totalorder %v414, 515
      %vm447 = vcmp.lt.s32.totalorder %v415, 515
      %vm448 = vcmp.lt.s32.totalorder %v416, 515
      %vm449 = vcmp.lt.s32.totalorder %v417, 515
      %vm450 = vcmp.lt.s32.totalorder %v418, 515
      %vm451 = vcmp.lt.s32.totalorder %v419, 515
      %vm452 = vcmp.lt.s32.totalorder %v420, 515
      %vm453 = vcmp.lt.s32.totalorder %v421, 515
      %vm454 = vcmp.lt.s32.totalorder %v422, 515
      %vm455 = vcmp.lt.s32.totalorder %v423, 515
      %vm456 = vcmp.lt.s32.totalorder %v424, 515
      %v457 = vsel %vm425, 1, 0
      %v458 = vsel %vm426, 1, 0
      %v459 = vsel %vm427, 1, 0
      %v460 = vsel %vm428, 1, 0
      %v461 = vsel %vm429, 1, 0
      %v462 = vsel %vm430, 1, 0
      %v463 = vsel %vm431, 1, 0
      %v464 = vsel %vm432, 1, 0
      %v465 = vsel %vm433, 1, 0
      %v466 = vsel %vm434, 1, 0
      %v467 = vsel %vm435, 1, 0
      %v468 = vsel %vm436, 1, 0
      %v469 = vsel %vm437, 1, 0
      %v470 = vsel %vm438, 1, 0
      %v471 = vsel %vm439, 1, 0
      %v472 = vsel %vm440, 1, 0
      %v473 = vsel %vm441, 1, 0
      %v474 = vsel %vm442, 1, 0
      %v475 = vsel %vm443, 1, 0
      %v476 = vsel %vm444, 1, 0
      %v477 = vsel %vm445, 1, 0
      %v478 = vsel %vm446, 1, 0
      %v479 = vsel %vm447, 1, 0
      %v480 = vsel %vm448, 1, 0
      %v481 = vsel %vm449, 1, 0
      %v482 = vsel %vm450, 1, 0
      %v483 = vsel %vm451, 1, 0
      %v484 = vsel %vm452, 1, 0
      %v485 = vsel %vm453, 1, 0
      %v486 = vsel %vm454, 1, 0
      %v487 = vsel %vm455, 1, 0
      %v488 = vsel %vm456, 1, 0
      %vm489 = vcmp.eq.s32.totalorder %v457, 1
      %vm490 = vcmp.eq.s32.totalorder %v458, 1
      %vm491 = vcmp.eq.s32.totalorder %v459, 1
      %vm492 = vcmp.eq.s32.totalorder %v460, 1
      %vm493 = vcmp.eq.s32.totalorder %v461, 1
      %vm494 = vcmp.eq.s32.totalorder %v462, 1
      %vm495 = vcmp.eq.s32.totalorder %v463, 1
      %vm496 = vcmp.eq.s32.totalorder %v464, 1
      %vm497 = vcmp.eq.s32.totalorder %v465, 1
      %vm498 = vcmp.eq.s32.totalorder %v466, 1
      %vm499 = vcmp.eq.s32.totalorder %v467, 1
      %vm500 = vcmp.eq.s32.totalorder %v468, 1
      %vm501 = vcmp.eq.s32.totalorder %v469, 1
      %vm502 = vcmp.eq.s32.totalorder %v470, 1
      %vm503 = vcmp.eq.s32.totalorder %v471, 1
      %vm504 = vcmp.eq.s32.totalorder %v472, 1
      %vm505 = vcmp.eq.s32.totalorder %v473, 1
      %vm506 = vcmp.eq.s32.totalorder %v474, 1
      %vm507 = vcmp.eq.s32.totalorder %v475, 1
      %vm508 = vcmp.eq.s32.totalorder %v476, 1
      %vm509 = vcmp.eq.s32.totalorder %v477, 1
      %vm510 = vcmp.eq.s32.totalorder %v478, 1
      %vm511 = vcmp.eq.s32.totalorder %v479, 1
      %vm512 = vcmp.eq.s32.totalorder %v480, 1
      %vm513 = vcmp.eq.s32.totalorder %v481, 1
      %vm514 = vcmp.eq.s32.totalorder %v482, 1
      %vm515 = vcmp.eq.s32.totalorder %v483, 1
      %vm516 = vcmp.eq.s32.totalorder %v484, 1
      %vm517 = vcmp.eq.s32.totalorder %v485, 1
      %vm518 = vcmp.eq.s32.totalorder %v486, 1
      %vm519 = vcmp.eq.s32.totalorder %v487, 1
      %vm520 = vcmp.eq.s32.totalorder %v488, 1
      %v521 = vsel %vm489, %v294, 0.0
      %v522 = vsel %vm489, %v295, 0.0
      %v523 = vsel %vm490, %v296, 0.0
      %v524 = vsel %vm490, %v297, 0.0
      %v525 = vsel %vm491, %v298, 0.0
      %v526 = vsel %vm491, %v299, 0.0
      %v527 = vsel %vm492, %v300, 0.0
      %v528 = vsel %vm492, %v301, 0.0
      %v529 = vsel %vm493, %v302, 0.0
      %v530 = vsel %vm493, %v303, 0.0
      %v531 = vsel %vm494, %v304, 0.0
      %v532 = vsel %vm494, %v305, 0.0
      %v533 = vsel %vm495, %v306, 0.0
      %v534 = vsel %vm495, %v307, 0.0
      %v535 = vsel %vm496, %v308, 0.0
      %v536 = vsel %vm496, %v309, 0.0
      %v537 = vsel %vm497, %v310, 0.0
      %v538 = vsel %vm497, %v311, 0.0
      %v539 = vsel %vm498, %v312, 0.0
      %v540 = vsel %vm498, %v313, 0.0
      %v541 = vsel %vm499, %v314, 0.0
      %v542 = vsel %vm499, %v315, 0.0
      %v543 = vsel %vm500, %v316, 0.0
      %v544 = vsel %vm500, %v317, 0.0
      %v545 = vsel %vm501, %v318, 0.0
      %v546 = vsel %vm501, %v319, 0.0
      %v547 = vsel %vm502, %v320, 0.0
      %v548 = vsel %vm502, %v321, 0.0
      %v549 = vsel %vm503, %v322, 0.0
      %v550 = vsel %vm503, %v323, 0.0
      %v551 = vsel %vm504, %v324, 0.0
      %v552 = vsel %vm504, %v325, 0.0
      %v553 = vsel %vm505, %v326, 0.0
      %v554 = vsel %vm505, %v327, 0.0
      %v555 = vsel %vm506, %v328, 0.0
      %v556 = vsel %vm506, %v329, 0.0
      %v557 = vsel %vm507, %v330, 0.0
      %v558 = vsel %vm507, %v331, 0.0
      %v559 = vsel %vm508, %v332, 0.0
      %v560 = vsel %vm508, %v333, 0.0
      %v561 = vsel %vm509, %v334, 0.0
      %v562 = vsel %vm509, %v335, 0.0
      %v563 = vsel %vm510, %v336, 0.0
      %v564 = vsel %vm510, %v337, 0.0
      %v565 = vsel %vm511, %v338, 0.0
      %v566 = vsel %vm511, %v339, 0.0
      %v567 = vsel %vm512, %v340, 0.0
      %v568 = vsel %vm512, %v341, 0.0
      %v569 = vsel %vm513, %v342, 0.0
      %v570 = vsel %vm513, %v343, 0.0
      %v571 = vsel %vm514, %v344, 0.0
      %v572 = vsel %vm514, %v345, 0.0
      %v573 = vsel %vm515, %v346, 0.0
      %v574 = vsel %vm515, %v347, 0.0
      %v575 = vsel %vm516, %v348, 0.0
      %v576 = vsel %vm516, %v349, 0.0
      %v577 = vsel %vm517, %v350, 0.0
      %v578 = vsel %vm517, %v351, 0.0
      %v579 = vsel %vm518, %v352, 0.0
      %v580 = vsel %vm518, %v353, 0.0
      %v581 = vsel %vm519, %v354, 0.0
      %v582 = vsel %vm519, %v355, 0.0
      %v583 = vsel %vm520, %v356, 0.0
      %v584 = vsel %vm520, %v357, 0.0
      %v585 = vadd.f32 %v521, %v523
      %v586 = vadd.f32 %v585, %v525
      %v587 = vadd.f32 %v586, %v527
      %v588 = vadd.f32 %v587, %v529
      %v589 = vadd.f32 %v588, %v531
      %v590 = vadd.f32 %v589, %v533
      %v591 = vadd.f32 %v590, %v535
      %v592 = vadd.f32 %v591, %v537
      %v593 = vadd.f32 %v592, %v539
      %v594 = vadd.f32 %v593, %v541
      %v595 = vadd.f32 %v594, %v543
      %v596 = vadd.f32 %v595, %v545
      %v597 = vadd.f32 %v596, %v547
      %v598 = vadd.f32 %v597, %v549
      %v599 = vadd.f32 %v598, %v551
      %v600 = vadd.f32 %v599, %v553
      %v601 = vadd.f32 %v600, %v555
      %v602 = vadd.f32 %v601, %v557
      %v603 = vadd.f32 %v602, %v559
      %v604 = vadd.f32 %v603, %v561
      %v605 = vadd.f32 %v604, %v563
      %v606 = vadd.f32 %v605, %v565
      %v607 = vadd.f32 %v606, %v567
      %v608 = vadd.f32 %v607, %v569
      %v609 = vadd.f32 %v608, %v571
      %v610 = vadd.f32 %v609, %v573
      %v611 = vadd.f32 %v610, %v575
      %v612 = vadd.f32 %v611, %v577
      %v613 = vadd.f32 %v612, %v579
      %v614 = vadd.f32 %v613, %v581
      %v615 = vadd.f32 %v614, %v583
      %v616 = vadd.f32 %v522, %v524
      %v617 = vadd.f32 %v616, %v526
      %v618 = vadd.f32 %v617, %v528
      %v619 = vadd.f32 %v618, %v530
      %v620 = vadd.f32 %v619, %v532
      %v621 = vadd.f32 %v620, %v534
      %v622 = vadd.f32 %v621, %v536
      %v623 = vadd.f32 %v622, %v538
      %v624 = vadd.f32 %v623, %v540
      %v625 = vadd.f32 %v624, %v542
      %v626 = vadd.f32 %v625, %v544
      %v627 = vadd.f32 %v626, %v546
      %v628 = vadd.f32 %v627, %v548
      %v629 = vadd.f32 %v628, %v550
      %v630 = vadd.f32 %v629, %v552
      %v631 = vadd.f32 %v630, %v554
      %v632 = vadd.f32 %v631, %v556
      %v633 = vadd.f32 %v632, %v558
      %v634 = vadd.f32 %v633, %v560
      %v635 = vadd.f32 %v634, %v562
      %v636 = vadd.f32 %v635, %v564
      %v637 = vadd.f32 %v636, %v566
      %v638 = vadd.f32 %v637, %v568
      %v639 = vadd.f32 %v638, %v570
      %v640 = vadd.f32 %v639, %v572
      %v641 = vadd.f32 %v640, %v574
      %v642 = vadd.f32 %v641, %v576
      %v643 = vadd.f32 %v642, %v578
      %v644 = vadd.f32 %v643, %v580
      %v645 = vadd.f32 %v644, %v582
      %v646 = vadd.f32 %v645, %v584
      %v647 = vadd.f32 %v92, %v615
      %v648 = vadd.f32 %v93, %v646
    $region26: #{tpu_custom_call.1} parent=1 // loop_footer
      %s91 = sadd.s32 1, %s87
    $region27: #{tpu_custom_call.1} parent=1 // loop_footer_branch
      %86 = sbr.rel target = $region23
    $region28: #{tpu_custom_call.1} parent=1 // loop_exit
      _
    %v649 = vld [vmem:[#allocation7] sm:$0xff]
    %v650 = vld [vmem:[#allocation7 + $0x8] sm:$0xff]
    %v651 = vadd.f32 %v649, %v92
    %v652 = vadd.f32 %v650, %v93
    %653 = vst [vmem:[#allocation7] sm:$0xff] %v651
    %654 = vst [vmem:[#allocation7 + $0x8] sm:$0xff] %v652
    // Predicated region
    $region29: #{tpu_custom_call.1} parent=1 // pred_check
      _
    $region30: #{tpu_custom_call.1} parent=1 // pred_check_branch
      %656 = sbr.rel (0) target = $region32
    $region31: #{tpu_custom_call.1} parent=1 // pred_region
      %s658 = ssub.s32 256, 256
      %659 = vsyncadd [#allocation4], %s658
      %s661 = sshll.u32 [#allocation7], 4
      %s662 = int_to_ptr.vmem [resolvable:$true] %s661
      %664 = dma.vmem_to_hbm [thread:$0]  %s662, 256, %s2, [#allocation4]
    $region32: #{tpu_custom_call.1} parent=1 // pred_fallthru
      _
    // Predicated region
    $region33: #{tpu_custom_call.1} parent=1 // pred_check
      _
    $region34: #{tpu_custom_call.1} parent=1 // pred_check_branch
      %666 = sbr.rel (0) target = $region36
    $region35: #{tpu_custom_call.1} parent=1 // pred_region
      %667 = dma.done [#allocation4], 256
    $region36: #{tpu_custom_call.1} parent=1 // pred_fallthru
      _
    %668 = vsyncpa [#allocation3], 1
    %669 = vsyncpa [#allocation6], 1
    %670 = vsyncpa [#allocation4], 1

</llo_original>
